<compile_context>
chip_gen: v6e
topology: v6e:2x2x1
jax: 0.10.0
libtpu: 0.0.40
codegen_flags: <defaults>
</compile_context>

<pallas_src>
import jax
import jax.numpy as jnp
from jax.experimental import pallas as pl
from jax.experimental.pallas import tpu as pltpu

_LANES = 128
_TM_DEFAULT = 128 * 1024      # ~1.5 MiB of x per grid step (review: 64K-256K range)
_TM_MAX = 256 * 1024          # 128*tm <= 32 MiB double-buffered VMEM, safe on v7x
_SPLIT_THRESHOLD = 16 * 1024  # min padded batch before forcing a 2-step grid (v7x 2 TCs)


def _linear_kernel(x_ref, w_ref, b_ref, o_ref):
    # x_ref: (in_f, TM) VMEM    w_ref: (in_f, 1) VMEM    b_ref: (1,) SMEM
    # o_ref: (1, TM)  VMEM  (batch on the lane axis -> dense, unmasked stores)
    #
    # One full-tile VPU multiply + one XLU sublane reduce; no per-sublane row
    # slices, no MXU (K=3, N=1 would waste the systolic array).
    prod = x_ref[...] * w_ref[...]                                   # (in_f, TM) VPU
    o_ref[...] = jnp.sum(prod, axis=0, keepdims=True) + b_ref[0]     # XLU reduce + bias


def linear_forward(x, w, b, *, tm=_TM_DEFAULT):
    """y = x @ w.T + b  (nn.Linear(3, 1) forward) via a lane-dense Pallas kernel."""
    batch, in_f = x.shape
    out_f = w.shape[0]
    assert out_f == 1 and w.shape == (out_f, in_f), "module is nn.Linear(3, 1)"

    # ---- tile / grid selection --------------------------------------------------
    b_pad = pl.cdiv(batch, _LANES) * _LANES               # pad batch to 128 only
    tm = max(_LANES, min(int(tm), _TM_MAX))
    n_steps = max(1, pl.cdiv(b_pad, tm))
    if n_steps == 1 and b_pad >= _SPLIT_THRESHOLD:
        n_steps = 2                                       # give v7x's 2nd TC work
    tm_eff = pl.cdiv(pl.cdiv(b_pad, n_steps), _LANES) * _LANES
    b_pad = n_steps * tm_eff                              # waste < 128 rows per step

    # ---- wrapper-side layout plumbing -------------------------------------------
    # TODO(synk): for production, produce/keep x in (in_f, batch) layout upstream
    # (or fuse this transpose into x's producer) — this HBM round trip moves more
    # bytes than the kernel itself at large batch.
    xt = jnp.pad(x.astype(jnp.float32).T, ((0, 0), (0, b_pad - batch)))  # (in_f, b_pad)
    w_col = w.astype(jnp.float32).reshape(in_f, 1)        # (3, 1) VMEM weight column
    b_vec = b.astype(jnp.float32).reshape(out_f)          # (1,)  SMEM bias scalar

    # Double-buffered, 8-sublane-padded x + out tiles ~= 128*tm bytes of VMEM.
    vmem_need = 128 * tm_eff
    vmem_limit = int(min(max(vmem_need + (4 << 20), 16 << 20), 48 << 20))

    out = pl.pallas_call(
        _linear_kernel,
        out_shape=jax.ShapeDtypeStruct((1, b_pad), jnp.float32),
        grid_spec=pl.GridSpec(
            grid=(n_steps,),
            in_specs=[
                pl.BlockSpec((in_f, tm_eff), lambda i: (0, i)),        # x tile (VMEM)
                pl.BlockSpec((in_f, 1), lambda i: (0, 0)),             # weight column
                pl.BlockSpec(memory_space=pltpu.MemorySpace.SMEM),     # bias scalar
            ],
            out_specs=pl.BlockSpec((1, tm_eff), lambda i: (0, i)),
        ),
        compiler_params=pltpu.CompilerParams(
            dimension_semantics=("parallel",),   # shards batch grid across TCs on v7x
            vmem_limit_bytes=vmem_limit,
        ),
    )(xt, w_col, b_vec)

    return out[0, :batch].reshape(batch, out_f)


if __name__ == "__main__":
    key = jax.random.PRNGKey(0)
    kx, kw, kb = jax.random.split(key, 3)

    batch, in_features, out_features = 8, 3, 1

    x = jax.random.normal(kx, (batch, in_features), dtype=jnp.float32)
    w = jax.random.normal(kw, (out_features, in_features), dtype=jnp.float32)
    b = jax.random.normal(kb, (out_features,), dtype=jnp.float32)

    y = linear_forward(x, w, b)
    y = jax.block_until_ready(y)

    # Reference check against plain JAX.
    y_ref = x @ w.T + b[None, :]
    assert y.shape == (batch, out_features)
    assert jnp.allclose(y, y_ref, atol=1e-5, rtol=1e-5)

    print("KERNEL_OK")
</pallas_src>

<mosaic_0001>
module attributes {stable_mosaic.version = 11 : i64} {
  func.func @_linear_kernel(%arg0: i32, %arg1: memref<3x128xf32, #tpu.memory_space<vmem>>, %arg2: memref<3x1xf32, #tpu.memory_space<vmem>>, %arg3: memref<1xf32, #tpu.memory_space<smem>>, %arg4: memref<1x128xf32, #tpu.memory_space<vmem>>) attributes {dimension_semantics = [#tpu.dimension_semantics<parallel>], iteration_bounds = array<i64: 1>, scalar_prefetch = 0 : i64, scratch_operands = 0 : i64, tpu.core_type = #tpu.core_type<tc>, window_params = [{transform_indices = @transform_0, window_bounds = array<i64: 3, 128>}, {pipeline_mode = #tpu.pipeline_mode<synchronous>, transform_indices = @transform_1, window_bounds = array<i64: 3, 1>}, {transform_indices = @transform_2, window_bounds = array<i64: 1>}, {transform_indices = @transform_3, window_bounds = array<i64: 1, 128>}]} {
    %c0 = arith.constant 0 : index
    %c0_0 = arith.constant 0 : index
    %0 = vector.load %arg1[%c0, %c0_0] : memref<3x128xf32, #tpu.memory_space<vmem>>, vector<3x128xf32>
    %c0_1 = arith.constant 0 : index
    %c0_2 = arith.constant 0 : index
    %1 = vector.load %arg2[%c0_1, %c0_2] : memref<3x1xf32, #tpu.memory_space<vmem>>, vector<3x1xf32>
    %2 = vector.broadcast %1 : vector<3x1xf32> to vector<3x128xf32>
    %3 = arith.mulf %0, %2 : vector<3x128xf32>
    %cst = arith.constant dense<0.000000e+00> : vector<128xf32>
    %4 = vector.multi_reduction <add>, %3, %cst [0] : vector<3x128xf32> to vector<128xf32>
    %5 = vector.shape_cast %4 : vector<128xf32> to vector<1x128xf32>
    %c0_3 = arith.constant 0 : index
    %6 = memref.load %arg3[%c0_3] : memref<1xf32, #tpu.memory_space<smem>>
    %7 = vector.broadcast %6 : f32 to vector<1x128xf32>
    %8 = arith.addf %5, %7 : vector<1x128xf32>
    %c0_4 = arith.constant 0 : index
    %c0_5 = arith.constant 0 : index
    %9 = vector.load %arg4[%c0_4, %c0_5] : memref<1x128xf32, #tpu.memory_space<vmem>>, vector<1x128xf32>
    tpu.vector_store %arg4[%c0_4, %c0_5], %8 {strides = array<i32>} : memref<1x128xf32, #tpu.memory_space<vmem>>, vector<1x128xf32>,
    return
  }
  func.func @transform_0(%arg0: i32) -> (i32, i32) {
    %c0_i32 = arith.constant 0 : i32
    %c0_i32_0 = arith.constant 0 : i32
    return %c0_i32, %arg0 : i32, i32
  }
  func.func @transform_1(%arg0: i32) -> (i32, i32) {
    %c0_i32 = arith.constant 0 : i32
    %c0_i32_0 = arith.constant 0 : i32
    %c0_i32_1 = arith.constant 0 : i32
    return %c0_i32, %c0_i32_0 : i32, i32
  }
  func.func @transform_2(%arg0: i32) -> i32 {
    %c0_i32 = arith.constant 0 : i32
    %c0_i32_0 = arith.constant 0 : i32
    return %c0_i32 : i32
  }
  func.func @transform_3(%arg0: i32) -> (i32, i32) {
    %c0_i32 = arith.constant 0 : i32
    %c0_i32_0 = arith.constant 0 : i32
    return %c0_i32, %arg0 : i32, i32
  }
}

</mosaic_0001>

<llo_original>
// kernel: tpu_custom_call.1
$region0: #{tpu_custom_call.1}
  #allocation0 [shape = 'u32[]', space=smem, size = 0x4, offset = 0x4, fixed_abs, tag = 'smem constant byte address 0x4 - core index']
  #allocation1 [shape = 'u32[144,128]{1,0:T(1,128)}', space=vmem, size = 0x12000, scoped, tag = 'internal scratch']
  #allocation2 [shape = 'f32[1]{0:T(128)S(6)}', space=smem, size = 0x200, scoped, tag = 'scoped memory for tpu_custom_call.1']
  %s0 = inlined_call_operand.vmem [shape: f32[3,128], index: 0, kind: input, shape index: {}]
  %s1 = inlined_call_operand.vmem [shape: f32[3,1], index: 1, kind: input, shape index: {}]
  %s2 = inlined_call_operand.<no memory space> [shape: f32[1], index: 2, kind: input, shape index: {}]
  %s3 = inlined_call_operand.hbm [shape: f32[1,128], index: 3, kind: output, shape index: {}]
  %s4 = sld [smem:[#allocation0]]
  $region22: #{tpu_custom_call.1} parent=0
    _
  %s6 = ssub.s32 1, %s4
  %s7 = scalar_select 0, %s6, %s4
  %8 = sst [smem:[#allocation2]] %s2
  $region1: #{tpu_custom_call.1} parent=0
    #allocation3 [shape = 'u8[512]{0}', space=vmem, size = 0x400, scoped, tag = 'output window, operand 0, single buffered']
    #allocation4 [shape = 's32[1]{0}', space=sflag, size = 0x4, scoped, tag = 'scoped memory for tpu_custom_call.1']
    %9 = vsyncpa [#allocation4], 0
    // Predicated region
    $region2: #{tpu_custom_call.1} parent=1 // pred_check
      _
    $region3: #{tpu_custom_call.1} parent=1 // pred_check_branch
      %11 = sbr.rel (0) target = $region5
    $region4: #{tpu_custom_call.1} parent=1 // pred_region
      _
    $region5: #{tpu_custom_call.1} parent=1 // pred_fallthru
      _
    // Predicated region
    $region6: #{tpu_custom_call.1} parent=1 // pred_check
      _
    $region7: #{tpu_custom_call.1} parent=1 // pred_check_branch
      %13 = sbr.rel (0) target = $region9
    $region8: #{tpu_custom_call.1} parent=1 // pred_region
      _
    $region9: #{tpu_custom_call.1} parent=1 // pred_fallthru
      _
    // Predicated region
    $region10: #{tpu_custom_call.1} parent=1 // pred_check
      _
    $region11: #{tpu_custom_call.1} parent=1 // pred_check_branch
      %15 = sbr.rel (0) target = $region13
    $region12: #{tpu_custom_call.1} parent=1 // pred_region
      _
    $region13: #{tpu_custom_call.1} parent=1 // pred_fallthru
      _
    %v16 = vld [vmem:[%s0] sm:$0x7]
    %v17 = vld [vmem:[%s1] sm:$0x7]
    %19 = vset.pattern.permute.xlu0 0
    %20 = vperm.xlu0 %19, %v17
    %v21 = vpop.permute.xlu0 %20
    %v23 = vmul.f32 %v16, %v21
    %vm24 = vcmask 1042432
    %v25 = vsel %vm24, %v23, 0.0
    %v26 = vrot.slane %v25, 4
    %v27 = vadd.f32 %v25, %v26
    %v28 = vrot.slane %v27, 2
    %v29 = vadd.f32 %v27, %v28
    %v30 = vrot.slane %v29, 1
    %v31 = vadd.f32 %v29, %v30
    %s32 = sld [smem:[#allocation2]]
    %v33 = vstv %s32
    %v34 = vadd.f32 %v31, %v33
    %35 = vst [vmem:[#allocation3] sm:$0x1] %v34
    // Predicated region
    $region14: #{tpu_custom_call.1} parent=1 // pred_check
      _
    $region15: #{tpu_custom_call.1} parent=1 // pred_check_branch
      %37 = sbr.rel (0) target = $region17
    $region16: #{tpu_custom_call.1} parent=1 // pred_region
      %s39 = ssub.s32 16, 16
      %40 = vsyncadd [#allocation4], %s39
      %s42 = sshll.u32 [#allocation3], 4
      %s43 = int_to_ptr.vmem [resolvable:$true] %s42
      %45 = dma.vmem_to_hbm [thread:$0]  %s43, 16, %s3, [#allocation4]
    $region17: #{tpu_custom_call.1} parent=1 // pred_fallthru
      _
    // Predicated region
    $region18: #{tpu_custom_call.1} parent=1 // pred_check
      _
    $region19: #{tpu_custom_call.1} parent=1 // pred_check_branch
      %47 = sbr.rel (0) target = $region21
    $region20: #{tpu_custom_call.1} parent=1 // pred_region
      %48 = dma.done [#allocation4], 16
    $region21: #{tpu_custom_call.1} parent=1 // pred_fallthru
      _
    %49 = vsyncpa [#allocation4], 1

</llo_original>
